<compile_context>
chip_gen: v7x
topology: tpu7x:2x2x1
jax: 0.10.0
libtpu: 0.0.40
codegen_flags: <defaults>
</compile_context>

<pallas_src>
import functools

import jax
import jax.numpy as jnp
from jax.experimental import pallas as pl
from jax.experimental.pallas import tpu as pltpu


def _round_up(x, k):
    return (x + k - 1) // k * k


def _make_kernel(n_valid, tile_n, compute_dtype):
    def kernel(x1_ref, x2_ref, wo_ref, bo_ref, wt_ref, bt_ref, wp_ref, bp_ref,
               out_ref):
        x1 = x1_ref[...]                      # [T, p_pad] compute_dtype
        x2 = x2_ref[...]
        bo = bo_ref[...]                      # [1, m_pad] f32
        bt = bt_ref[...]
        bp = bp_ref[...]

        # Online / target linear projections (MXU, f32 accumulate).
        zo = jnp.dot(x1, wo_ref[...], preferred_element_type=jnp.float32) + bo
        zt = jnp.dot(x2, wt_ref[...], preferred_element_type=jnp.float32) + bt

        # SymReLU(z, b) = relu(z) - relu(2b - z); 2b precomputed per [1, m].
        two_bo = bo + bo
        two_bt = bt + bt
        zo = jnp.maximum(zo, 0.0) - jnp.maximum(two_bo - zo, 0.0)
        zt = jnp.maximum(zt, 0.0) - jnp.maximum(two_bt - zt, 0.0)

        # Shared predictor Wp: one tall fused matmul over [zo; zt].
        zcat = jnp.concatenate([zo, zt], axis=0).astype(compute_dtype)
        pcat = jnp.dot(zcat, wp_ref[...], preferred_element_type=jnp.float32) + bp
        po = pcat[:tile_n]
        pt = pcat[tile_n:]

        # Cosine-form loss (F.normalize eps semantics: 1/max(||v||, 1e-12)).
        def inv_norm(ss):
            return jax.lax.rsqrt(jnp.maximum(ss, 1e-24))

        ss_zo = jnp.sum(zo * zo, axis=1, keepdims=True)   # [T, 1]
        ss_zt = jnp.sum(zt * zt, axis=1, keepdims=True)
        ss_po = jnp.sum(po * po, axis=1, keepdims=True)
        ss_pt = jnp.sum(pt * pt, axis=1, keepdims=True)
        d_po_zt = jnp.sum(po * zt, axis=1, keepdims=True)
        d_zo_pt = jnp.sum(zo * pt, axis=1, keepdims=True)

        i_zo = inv_norm(ss_zo)
        i_zt = inv_norm(ss_zt)
        i_po = inv_norm(ss_po)
        i_pt = inv_norm(ss_pt)

        l1 = ss_po * i_po * i_po + ss_zt * i_zt * i_zt \
            - 2.0 * d_po_zt * i_po * i_zt
        l2 = ss_zo * i_zo * i_zo + ss_pt * i_pt * i_pt \
            - 2.0 * d_zo_pt * i_zo * i_pt

        # Mask padded batch rows of this tile.
        row = jax.lax.broadcasted_iota(jnp.int32, (tile_n, 1), 0)
        row = row + pl.program_id(0) * tile_n
        valid = (row < n_valid).astype(jnp.float32)

        partial = jnp.sum(0.5 * (l1 + l2) * valid)        # scalar partial sum
        out_ref[...] = jnp.broadcast_to(partial, (1, 128)).astype(jnp.float32)

    return kernel


def sparse_contrastive_loss(x1, x2, wo_t, bo, wt_t, bt, wp_t, bp,
                            *, compute_dtype=jnp.bfloat16, tile_n=None):
    """Forward loss of SparseContrastiveModelNoAlter.

    x1, x2: [N, p].  wo_t, wt_t: [p, m] (pre-transposed Linear weights).
    wp_t: [m, m].  bo, bt, bp: [1, m].  Returns a scalar f32 loss.
    """
    n, p = x1.shape
    m = wo_t.shape[1]
    p_pad = _round_up(p, 128)
    m_pad = _round_up(m, 128)
    cbytes = jnp.dtype(compute_dtype).itemsize

    # --- pick a batch tile against a v7x-safe dynamic-VMEM budget -----------
    if tile_n is None:
        budget = 40 << 20   # dynamic working set budget (inputs + activations)
        tile = 512
        while tile > 16 and (2 * 2 * tile * p_pad * cbytes     # x1/x2, 2 bufs
                             + 12 * tile * m_pad * 4) > budget:  # f32 temps
            tile //= 2
        tile_n = tile
    tile_n = max(16, _round_up(min(tile_n, _round_up(n, 16)), 16))
    n_pad = _round_up(n, tile_n)
    n_blocks = n_pad // tile_n

    # --- pad everything to lane-dense / tile-aligned shapes -----------------
    f32 = jnp.float32

    def pad2(a, rows, cols, dt):
        a = a.astype(f32)
        a = jnp.pad(a, ((0, rows - a.shape[0]), (0, cols - a.shape[1])))
        return a.astype(dt)

    x1p = pad2(x1, n_pad, p_pad, compute_dtype)
    x2p = pad2(x2, n_pad, p_pad, compute_dtype)
    wop = pad2(wo_t, p_pad, m_pad, compute_dtype)
    wtp = pad2(wt_t, p_pad, m_pad, compute_dtype)
    wpp = pad2(wp_t, m_pad, m_pad, compute_dtype)
    bop = pad2(bo, 1, m_pad, f32)
    btp = pad2(bt, 1, m_pad, f32)
    bpp = pad2(bp, 1, m_pad, f32)

    # --- explicit VMEM budget ------------------------------------------------
    # TODO(synk): if the resident weights themselves exceed VMEM (very large
    # p/m), also tile the m / k axes of the matmuls.
    weight_bytes = (2 * p_pad * m_pad + m_pad * m_pad) * cbytes + 3 * m_pad * 4
    io_bytes = 2 * 2 * tile_n * p_pad * cbytes + 2 * 128 * 4   # double-buffered
    act_bytes = 12 * tile_n * m_pad * 4
    est = weight_bytes + io_bytes + act_bytes
    vmem_limit = int(min(max(int(1.5 * est), 32 << 20), 100 << 20))

    grid_spec = pltpu.PrefetchScalarGridSpec(
        num_scalar_prefetch=0,
        grid=(n_blocks,),
        in_specs=[
            pl.BlockSpec((tile_n, p_pad), lambda i: (i, 0)),   # x1 tile
            pl.BlockSpec((tile_n, p_pad), lambda i: (i, 0)),   # x2 tile
            pl.BlockSpec((p_pad, m_pad), lambda i: (0, 0)),    # Wo^T resident
            pl.BlockSpec((1, m_pad), lambda i: (0, 0)),        # bo
            pl.BlockSpec((p_pad, m_pad), lambda i: (0, 0)),    # Wt^T resident
            pl.BlockSpec((1, m_pad), lambda i: (0, 0)),        # bt
            pl.BlockSpec((m_pad, m_pad), lambda i: (0, 0)),    # Wp^T resident
            pl.BlockSpec((1, m_pad), lambda i: (0, 0)),        # bp
        ],
        out_specs=pl.BlockSpec((1, 128), lambda i: (i, 0)),    # per-block partial
    )

    partials = pl.pallas_call(
        _make_kernel(n, tile_n, compute_dtype),
        out_shape=jax.ShapeDtypeStruct((n_blocks, 128), jnp.float32),
        grid_spec=grid_spec,
        compiler_params=pltpu.CompilerParams(
            dimension_semantics=("parallel",),
            vmem_limit_bytes=vmem_limit),
    )(x1p, x2p, wop, bop, wtp, btp, wpp, bpp)

    return jnp.sum(partials[:, 0]) / n


def _reference(x1, x2, wo_t, bo, wt_t, bt, wp_t, bp):
    """Plain-JAX f32 reference matching the PyTorch forward."""
    hi = jax.lax.Precision.HIGHEST
    zo = jnp.dot(x1, wo_t, precision=hi) + bo
    zt = jnp.dot(x2, wt_t, precision=hi) + bt
    zo = jnp.maximum(zo, 0.0) - jnp.maximum(2.0 * bo - zo, 0.0)
    zt = jnp.maximum(zt, 0.0) - jnp.maximum(2.0 * bt - zt, 0.0)
    po = jnp.dot(zo, wp_t, precision=hi) + bp
    pt = jnp.dot(zt, wp_t, precision=hi) + bp

    def norm(v):
        return v / jnp.maximum(
            jnp.sqrt(jnp.sum(v * v, axis=1, keepdims=True)), 1e-12)

    zo_n, zt_n, po_n, pt_n = map(norm, (zo, zt, po, pt))
    return 0.5 * (jnp.mean(jnp.sum((po_n - zt_n) ** 2, -1)) +
                  jnp.mean(jnp.sum((zo_n - pt_n) ** 2, -1)))


if __name__ == "__main__":
    # Small shapes consistent with the module: batch N, input dim p, rep dim m.
    N, p, m = 8, 32, 32

    key = jax.random.PRNGKey(0)
    k_x1, k_x2, k_wo, k_bo, k_wt, k_bt, k_wp, k_bp = jax.random.split(key, 8)

    x1 = jax.random.normal(k_x1, (N, p), dtype=jnp.float32)
    x2 = jax.random.normal(k_x2, (N, p), dtype=jnp.float32)

    # Deterministic parameter init (Wo_init / Wt_init stand-ins + Linear
    # biases), matching nn.Linear's uniform(-1/sqrt(fan_in), 1/sqrt(fan_in)).
    s_p = 1.0 / jnp.sqrt(p)
    s_m = 1.0 / jnp.sqrt(m)
    wo_t = jax.random.uniform(k_wo, (p, m), jnp.float32, -s_p, s_p)  # Wo^T
    wt_t = jax.random.uniform(k_wt, (p, m), jnp.float32, -s_p, s_p)  # Wt^T
    bo = jax.random.uniform(k_bo, (1, m), jnp.float32, -s_p, s_p)
    bt = jax.random.uniform(k_bt, (1, m), jnp.float32, -s_p, s_p)
    wp_t = jax.random.uniform(k_wp, (m, m), jnp.float32, -s_m, s_m)  # Wp^T
    bp = jax.random.uniform(k_bp, (1, m), jnp.float32, -s_m, s_m)

    ref = _reference(x1, x2, wo_t, bo, wt_t, bt, wp_t, bp)

    # f32 compute path.
    loss_f32 = sparse_contrastive_loss(x1, x2, wo_t, bo, wt_t, bt, wp_t, bp,
                                       compute_dtype=jnp.float32)
    jax.block_until_ready(loss_f32)
    assert jnp.allclose(loss_f32, ref, rtol=5e-2, atol=5e-2), (loss_f32, ref)

    # bf16 fast path (default).
    loss_bf16 = sparse_contrastive_loss(x1, x2, wo_t, bo, wt_t, bt, wp_t, bp)
    jax.block_until_ready(loss_bf16)
    assert jnp.allclose(loss_bf16, ref, rtol=5e-2, atol=5e-2), (loss_bf16, ref)

    print("KERNEL_OK")
</pallas_src>

<mosaic_0001>
module attributes {stable_mosaic.version = 11 : i64} {
  func.func @kernel(%arg0: i32, %arg1: memref<16x128xf32, #tpu.memory_space<vmem>>, %arg2: memref<16x128xf32, #tpu.memory_space<vmem>>, %arg3: memref<128x128xf32, #tpu.memory_space<vmem>>, %arg4: memref<1x128xf32, #tpu.memory_space<vmem>>, %arg5: memref<128x128xf32, #tpu.memory_space<vmem>>, %arg6: memref<1x128xf32, #tpu.memory_space<vmem>>, %arg7: memref<128x128xf32, #tpu.memory_space<vmem>>, %arg8: memref<1x128xf32, #tpu.memory_space<vmem>>, %arg9: memref<1x128xf32, #tpu.memory_space<vmem>>) attributes {dimension_semantics = [#tpu.dimension_semantics<parallel>], iteration_bounds = array<i64: 1>, scalar_prefetch = 0 : i64, scratch_operands = 0 : i64, tpu.core_type = #tpu.core_type<tc>, window_params = [{transform_indices = @transform_0, window_bounds = array<i64: 16, 128>}, {transform_indices = @transform_1, window_bounds = array<i64: 16, 128>}, {pipeline_mode = #tpu.pipeline_mode<synchronous>, transform_indices = @transform_2, window_bounds = array<i64: 128, 128>}, {pipeline_mode = #tpu.pipeline_mode<synchronous>, transform_indices = @transform_3, window_bounds = array<i64: 1, 128>}, {pipeline_mode = #tpu.pipeline_mode<synchronous>, transform_indices = @transform_4, window_bounds = array<i64: 128, 128>}, {pipeline_mode = #tpu.pipeline_mode<synchronous>, transform_indices = @transform_5, window_bounds = array<i64: 1, 128>}, {pipeline_mode = #tpu.pipeline_mode<synchronous>, transform_indices = @transform_6, window_bounds = array<i64: 128, 128>}, {pipeline_mode = #tpu.pipeline_mode<synchronous>, transform_indices = @transform_7, window_bounds = array<i64: 1, 128>}, {transform_indices = @transform_8, window_bounds = array<i64: 1, 128>}]} {
    %c0 = arith.constant 0 : index
    %c0_0 = arith.constant 0 : index
    %0 = vector.load %arg1[%c0, %c0_0] : memref<16x128xf32, #tpu.memory_space<vmem>>, vector<16x128xf32>
    %c0_1 = arith.constant 0 : index
    %c0_2 = arith.constant 0 : index
    %1 = vector.load %arg2[%c0_1, %c0_2] : memref<16x128xf32, #tpu.memory_space<vmem>>, vector<16x128xf32>
    %c0_3 = arith.constant 0 : index
    %c0_4 = arith.constant 0 : index
    %2 = vector.load %arg4[%c0_3, %c0_4] : memref<1x128xf32, #tpu.memory_space<vmem>>, vector<1x128xf32>
    %c0_5 = arith.constant 0 : index
    %c0_6 = arith.constant 0 : index
    %3 = vector.load %arg6[%c0_5, %c0_6] : memref<1x128xf32, #tpu.memory_space<vmem>>, vector<1x128xf32>
    %c0_7 = arith.constant 0 : index
    %c0_8 = arith.constant 0 : index
    %4 = vector.load %arg8[%c0_7, %c0_8] : memref<1x128xf32, #tpu.memory_space<vmem>>, vector<1x128xf32>
    %c0_9 = arith.constant 0 : index
    %c0_10 = arith.constant 0 : index
    %5 = vector.load %arg3[%c0_9, %c0_10] : memref<128x128xf32, #tpu.memory_space<vmem>>, vector<128x128xf32>
    %cst = arith.constant dense<0.000000e+00> : vector<16x128xf32>
    %6 = tpu.matmul %0, %5, %cst {dimension_numbers = #tpu.dot_dimension_numbers<[1], [0], [0], [1], [0, 0, 1, 1], [], []>} : vector<16x128xf32>, vector<128x128xf32>, vector<16x128xf32> -> vector<16x128xf32>
    %7 = vector.broadcast %2 : vector<1x128xf32> to vector<16x128xf32>
    %8 = arith.addf %6, %7 : vector<16x128xf32>
    %c0_11 = arith.constant 0 : index
    %c0_12 = arith.constant 0 : index
    %9 = vector.load %arg5[%c0_11, %c0_12] : memref<128x128xf32, #tpu.memory_space<vmem>>, vector<128x128xf32>
    %cst_13 = arith.constant dense<0.000000e+00> : vector<16x128xf32>
    %10 = tpu.matmul %1, %9, %cst_13 {dimension_numbers = #tpu.dot_dimension_numbers<[1], [0], [0], [1], [0, 0, 1, 1], [], []>} : vector<16x128xf32>, vector<128x128xf32>, vector<16x128xf32> -> vector<16x128xf32>
    %11 = vector.broadcast %3 : vector<1x128xf32> to vector<16x128xf32>
    %12 = arith.addf %10, %11 : vector<16x128xf32>
    %13 = arith.addf %2, %2 : vector<1x128xf32>
    %14 = arith.addf %3, %3 : vector<1x128xf32>
    %cst_14 = arith.constant 0.000000e+00 : f32
    %15 = vector.broadcast %cst_14 : f32 to vector<16x128xf32>
    %16 = arith.maximumf %8, %15 : vector<16x128xf32>
    %17 = vector.broadcast %13 : vector<1x128xf32> to vector<16x128xf32>
    %18 = arith.subf %17, %8 : vector<16x128xf32>
    %cst_15 = arith.constant 0.000000e+00 : f32
    %19 = vector.broadcast %cst_15 : f32 to vector<16x128xf32>
    %20 = arith.maximumf %18, %19 : vector<16x128xf32>
    %21 = arith.subf %16, %20 : vector<16x128xf32>
    %cst_16 = arith.constant 0.000000e+00 : f32
    %22 = vector.broadcast %cst_16 : f32 to vector<16x128xf32>
    %23 = arith.maximumf %12, %22 : vector<16x128xf32>
    %24 = vector.broadcast %14 : vector<1x128xf32> to vector<16x128xf32>
    %25 = arith.subf %24, %12 : vector<16x128xf32>
    %cst_17 = arith.constant 0.000000e+00 : f32
    %26 = vector.broadcast %cst_17 : f32 to vector<16x128xf32>
    %27 = arith.maximumf %25, %26 : vector<16x128xf32>
    %28 = arith.subf %23, %27 : vector<16x128xf32>
    %29 = tpu.concatenate %21, %28 in 0 : vector<16x128xf32>, vector<16x128xf32> -> vector<32x128xf32>
    %c0_18 = arith.constant 0 : index
    %c0_19 = arith.constant 0 : index
    %30 = vector.load %arg7[%c0_18, %c0_19] : memref<128x128xf32, #tpu.memory_space<vmem>>, vector<128x128xf32>
    %cst_20 = arith.constant dense<0.000000e+00> : vector<32x128xf32>
    %31 = tpu.matmul %29, %30, %cst_20 {dimension_numbers = #tpu.dot_dimension_numbers<[1], [0], [0], [1], [0, 0, 1, 1], [], []>} : vector<32x128xf32>, vector<128x128xf32>, vector<32x128xf32> -> vector<32x128xf32>
    %32 = vector.broadcast %4 : vector<1x128xf32> to vector<32x128xf32>
    %33 = arith.addf %31, %32 : vector<32x128xf32>
    %34 = vector.extract_strided_slice %33 {offsets = [0, 0], sizes = [16, 128], strides = [1, 1]} : vector<32x128xf32> to vector<16x128xf32>
    %35 = vector.extract_strided_slice %33 {offsets = [16, 0], sizes = [16, 128], strides = [1, 1]} : vector<32x128xf32> to vector<16x128xf32>
    %36 = arith.mulf %21, %21 : vector<16x128xf32>
    %cst_21 = arith.constant dense<0.000000e+00> : vector<16xf32>
    %37 = vector.multi_reduction <add>, %36, %cst_21 [1] : vector<16x128xf32> to vector<16xf32>
    %38 = vector.shape_cast %37 : vector<16xf32> to vector<16x1xf32>
    %39 = arith.mulf %28, %28 : vector<16x128xf32>
    %cst_22 = arith.constant dense<0.000000e+00> : vector<16xf32>
    %40 = vector.multi_reduction <add>, %39, %cst_22 [1] : vector<16x128xf32> to vector<16xf32>
    %41 = vector.shape_cast %40 : vector<16xf32> to vector<16x1xf32>
    %42 = arith.mulf %34, %34 : vector<16x128xf32>
    %cst_23 = arith.constant dense<0.000000e+00> : vector<16xf32>
    %43 = vector.multi_reduction <add>, %42, %cst_23 [1] : vector<16x128xf32> to vector<16xf32>
    %44 = vector.shape_cast %43 : vector<16xf32> to vector<16x1xf32>
    %45 = arith.mulf %35, %35 : vector<16x128xf32>
    %cst_24 = arith.constant dense<0.000000e+00> : vector<16xf32>
    %46 = vector.multi_reduction <add>, %45, %cst_24 [1] : vector<16x128xf32> to vector<16xf32>
    %47 = vector.shape_cast %46 : vector<16xf32> to vector<16x1xf32>
    %48 = arith.mulf %34, %28 : vector<16x128xf32>
    %cst_25 = arith.constant dense<0.000000e+00> : vector<16xf32>
    %49 = vector.multi_reduction <add>, %48, %cst_25 [1] : vector<16x128xf32> to vector<16xf32>
    %50 = vector.shape_cast %49 : vector<16xf32> to vector<16x1xf32>
    %51 = arith.mulf %21, %35 : vector<16x128xf32>
    %cst_26 = arith.constant dense<0.000000e+00> : vector<16xf32>
    %52 = vector.multi_reduction <add>, %51, %cst_26 [1] : vector<16x128xf32> to vector<16xf32>
    %53 = vector.shape_cast %52 : vector<16xf32> to vector<16x1xf32>
    %cst_27 = arith.constant 1.000000e-24 : f32
    %54 = vector.broadcast %cst_27 : f32 to vector<16x1xf32>
    %55 = arith.maximumf %38, %54 : vector<16x1xf32>
    %56 = math.rsqrt %55 : vector<16x1xf32>
    %cst_28 = arith.constant 1.000000e-24 : f32
    %57 = vector.broadcast %cst_28 : f32 to vector<16x1xf32>
    %58 = arith.maximumf %41, %57 : vector<16x1xf32>
    %59 = math.rsqrt %58 : vector<16x1xf32>
    %cst_29 = arith.constant 1.000000e-24 : f32
    %60 = vector.broadcast %cst_29 : f32 to vector<16x1xf32>
    %61 = arith.maximumf %44, %60 : vector<16x1xf32>
    %62 = math.rsqrt %61 : vector<16x1xf32>
    %cst_30 = arith.constant 1.000000e-24 : f32
    %63 = vector.broadcast %cst_30 : f32 to vector<16x1xf32>
    %64 = arith.maximumf %47, %63 : vector<16x1xf32>
    %65 = math.rsqrt %64 : vector<16x1xf32>
    %66 = arith.mulf %44, %62 : vector<16x1xf32>
    %67 = arith.mulf %66, %62 : vector<16x1xf32>
    %68 = arith.mulf %41, %59 : vector<16x1xf32>
    %69 = arith.mulf %68, %59 : vector<16x1xf32>
    %70 = arith.addf %67, %69 : vector<16x1xf32>
    %cst_31 = arith.constant 2.000000e+00 : f32
    %71 = vector.broadcast %cst_31 : f32 to vector<16x1xf32>
    %72 = arith.mulf %71, %50 : vector<16x1xf32>
    %73 = arith.mulf %72, %62 : vector<16x1xf32>
    %74 = arith.mulf %73, %59 : vector<16x1xf32>
    %75 = arith.subf %70, %74 : vector<16x1xf32>
    %76 = arith.mulf %38, %56 : vector<16x1xf32>
    %77 = arith.mulf %76, %56 : vector<16x1xf32>
    %78 = arith.mulf %47, %65 : vector<16x1xf32>
    %79 = arith.mulf %78, %65 : vector<16x1xf32>
    %80 = arith.addf %77, %79 : vector<16x1xf32>
    %cst_32 = arith.constant 2.000000e+00 : f32
    %81 = vector.broadcast %cst_32 : f32 to vector<16x1xf32>
    %82 = arith.mulf %81, %53 : vector<16x1xf32>
    %83 = arith.mulf %82, %56 : vector<16x1xf32>
    %84 = arith.mulf %83, %65 : vector<16x1xf32>
    %85 = arith.subf %80, %84 : vector<16x1xf32>
    %86 = tpu.iota {dimensions = array<i32: 0>} : vector<16x1xi32>
    %c16_i32 = arith.constant 16 : i32
    %87 = arith.muli %arg0, %c16_i32 : i32
    %88 = vector.broadcast %87 : i32 to vector<16x1xi32>
    %89 = arith.addi %86, %88 : vector<16x1xi32>
    %c8_i32 = arith.constant 8 : i32
    %90 = vector.broadcast %c8_i32 : i32 to vector<16x1xi32>
    %91 = arith.cmpi slt, %89, %90 : vector<16x1xi32>
    %92 = arith.extui %91 : vector<16x1xi1> to vector<16x1xi32>
    %93 = arith.sitofp %92 : vector<16x1xi32> to vector<16x1xf32>
    %94 = arith.addf %75, %85 : vector<16x1xf32>
    %cst_33 = arith.constant 5.000000e-01 : f32
    %95 = vector.broadcast %cst_33 : f32 to vector<16x1xf32>
    %96 = arith.mulf %95, %94 : vector<16x1xf32>
    %97 = arith.mulf %96, %93 : vector<16x1xf32>
    %98 = vector.shape_cast %97 : vector<16x1xf32> to vector<1x16x1xf32>
    %cst_34 = arith.constant dense<0.000000e+00> : vector<1xf32>
    %99 = vector.multi_reduction <add>, %98, %cst_34 [1, 2] : vector<1x16x1xf32> to vector<1xf32>
    %100 = vector.shape_cast %99 : vector<1xf32> to vector<1x1x1xf32>
    %101 = vector.extract %100[0, 0, 0] : f32 from vector<1x1x1xf32>
    %102 = vector.broadcast %101 : f32 to vector<1x128xf32>
    %c0_35 = arith.constant 0 : index
    %c0_36 = arith.constant 0 : index
    %103 = vector.load %arg9[%c0_35, %c0_36] : memref<1x128xf32, #tpu.memory_space<vmem>>, vector<1x128xf32>
    tpu.vector_store %arg9[%c0_35, %c0_36], %102 {strides = array<i32>} : memref<1x128xf32, #tpu.memory_space<vmem>>, vector<1x128xf32>,
    return
  }
  func.func @transform_0(%arg0: i32) -> (i32, i32) {
    %c0_i32 = arith.constant 0 : i32
    %c0_i32_0 = arith.constant 0 : i32
    return %arg0, %c0_i32 : i32, i32
  }
  func.func @transform_1(%arg0: i32) -> (i32, i32) {
    %c0_i32 = arith.constant 0 : i32
    %c0_i32_0 = arith.constant 0 : i32
    return %arg0, %c0_i32 : i32, i32
  }
  func.func @transform_2(%arg0: i32) -> (i32, i32) {
    %c0_i32 = arith.constant 0 : i32
    %c0_i32_0 = arith.constant 0 : i32
    %c0_i32_1 = arith.constant 0 : i32
    return %c0_i32, %c0_i32_0 : i32, i32
  }
  func.func @transform_3(%arg0: i32) -> (i32, i32) {
    %c0_i32 = arith.constant 0 : i32
    %c0_i32_0 = arith.constant 0 : i32
    %c0_i32_1 = arith.constant 0 : i32
    return %c0_i32, %c0_i32_0 : i32, i32
  }
  func.func @transform_4(%arg0: i32) -> (i32, i32) {
    %c0_i32 = arith.constant 0 : i32
    %c0_i32_0 = arith.constant 0 : i32
    %c0_i32_1 = arith.constant 0 : i32
    return %c0_i32, %c0_i32_0 : i32, i32
  }
  func.func @transform_5(%arg0: i32) -> (i32, i32) {
    %c0_i32 = arith.constant 0 : i32
    %c0_i32_0 = arith.constant 0 : i32
    %c0_i32_1 = arith.constant 0 : i32
    return %c0_i32, %c0_i32_0 : i32, i32
  }
  func.func @transform_6(%arg0: i32) -> (i32, i32) {
    %c0_i32 = arith.constant 0 : i32
    %c0_i32_0 = arith.constant 0 : i32
    %c0_i32_1 = arith.constant 0 : i32
    return %c0_i32, %c0_i32_0 : i32, i32
  }
  func.func @transform_7(%arg0: i32) -> (i32, i32) {
    %c0_i32 = arith.constant 0 : i32
    %c0_i32_0 = arith.constant 0 : i32
    %c0_i32_1 = arith.constant 0 : i32
    return %c0_i32, %c0_i32_0 : i32, i32
  }
  func.func @transform_8(%arg0: i32) -> (i32, i32) {
    %c0_i32 = arith.constant 0 : i32
    %c0_i32_0 = arith.constant 0 : i32
    return %arg0, %c0_i32 : i32, i32
  }
}

</mosaic_0001>

<llo_original>
// kernel: tpu_custom_call.1
$region0: #{tpu_custom_call.1}
  #allocation0 [shape = 'u32[]', space=smem, size = 0x4, offset = 0x4, fixed_abs, tag = 'smem constant byte address 0x4 - core index']
  #allocation1 [shape = 'u32[144,128]{1,0:T(1,128)}', space=vmem, size = 0x12000, scoped, tag = 'internal scratch']
  %s0 = inlined_call_operand.hbm [shape: f32[16,128], index: 0, kind: input, shape index: {}]
  %s1 = inlined_call_operand.hbm [shape: f32[16,128], index: 1, kind: input, shape index: {}]
  %s2 = inlined_call_operand.hbm [shape: f32[128,128], index: 2, kind: input, shape index: {}]
  %s3 = inlined_call_operand.vmem [shape: f32[1,128], index: 3, kind: input, shape index: {}]
  %s4 = inlined_call_operand.hbm [shape: f32[128,128], index: 4, kind: input, shape index: {}]
  %s5 = inlined_call_operand.vmem [shape: f32[1,128], index: 5, kind: input, shape index: {}]
  %s6 = inlined_call_operand.hbm [shape: f32[128,128], index: 6, kind: input, shape index: {}]
  %s7 = inlined_call_operand.vmem [shape: f32[1,128], index: 7, kind: input, shape index: {}]
  %s8 = inlined_call_operand.hbm [shape: f32[1,128], index: 8, kind: output, shape index: {}]
  %s9 = sld [smem:[#allocation0]]
  $region62: #{tpu_custom_call.1} parent=0
    _
  %s11 = ssub.s32 1, %s9
  %s12 = scalar_select 0, %s11, %s9
  $region1: #{tpu_custom_call.1} parent=0
    #allocation2 [shape = 'u8[8192]{0}', space=vmem, size = 0x2000, scoped, tag = 'input window, operand 0, single buffered']
    #allocation3 [shape = 's32[1]{0}', space=sflag, size = 0x4, scoped, tag = 'scoped memory for tpu_custom_call.1']
    #allocation4 [shape = 's32[1]{0}', space=sflag, size = 0x4, scoped, tag = 'scoped memory for tpu_custom_call.1']
    #allocation5 [shape = 'u8[8192]{0}', space=vmem, size = 0x2000, scoped, tag = 'input window, operand 1, single buffered']
    #allocation6 [shape = 's32[1]{0}', space=sflag, size = 0x4, scoped, tag = 'scoped memory for tpu_custom_call.1']
    #allocation7 [shape = 'u8[65536]{0}', space=vmem, size = 0x10000, scoped, tag = 'input window, operand 2, single buffered']
    #allocation8 [shape = 'u8[65536]{0}', space=vmem, size = 0x10000, scoped, tag = 'input window, operand 4, single buffered']
    #allocation9 [shape = 's32[1]{0}', space=sflag, size = 0x4, scoped, tag = 'scoped memory for tpu_custom_call.1']
    #allocation10 [shape = 'u8[65536]{0}', space=vmem, size = 0x10000, scoped, tag = 'input window, operand 6, single buffered']
    #allocation11 [shape = 'u8[512]{0}', space=vmem, size = 0x400, scoped, tag = 'output window, operand 0, single buffered']
    %13 = vsyncpa [#allocation3], 0
    %14 = vsyncpa [#allocation6], 0
    %15 = vsyncpa [#allocation9], 0
    %16 = vsyncpa [#allocation4], 0
    // Predicated region
    $region2: #{tpu_custom_call.1} parent=1 // pred_check
      _
    $region3: #{tpu_custom_call.1} parent=1 // pred_check_branch
      %18 = sbr.rel (0) target = $region5
    $region4: #{tpu_custom_call.1} parent=1 // pred_region
      %s20 = ssub.s32 256, 256
      %21 = vsyncadd [#allocation3], %s20
      %s22 = sshll.u32 [#allocation2], 4
      %s23 = int_to_ptr.vmem [resolvable:$true] %s22
      %28 = dma.hbm_to_vmem [thread:$0]  %s0, 256, %s23, [#allocation3], 128, 128, 8
    $region5: #{tpu_custom_call.1} parent=1 // pred_fallthru
      _
    // Predicated region
    $region6: #{tpu_custom_call.1} parent=1 // pred_check
      _
    $region7: #{tpu_custom_call.1} parent=1 // pred_check_branch
      %30 = sbr.rel (0) target = $region9
    $region8: #{tpu_custom_call.1} parent=1 // pred_region
      %s32 = ssub.s32 256, 256
      %33 = vsyncadd [#allocation6], %s32
      %s34 = sshll.u32 [#allocation5], 4
      %s35 = int_to_ptr.vmem [resolvable:$true] %s34
      %40 = dma.hbm_to_vmem [thread:$0]  %s1, 256, %s35, [#allocation6], 128, 128, 8
    $region9: #{tpu_custom_call.1} parent=1 // pred_fallthru
      _
    // Predicated region
    $region10: #{tpu_custom_call.1} parent=1 // pred_check
      _
    $region11: #{tpu_custom_call.1} parent=1 // pred_check_branch
      %42 = sbr.rel (0) target = $region13
    $region12: #{tpu_custom_call.1} parent=1 // pred_region
      %s44 = ssub.s32 2048, 2048
      %45 = vsyncadd [#allocation6], %s44
      %s46 = sshll.u32 [#allocation7], 4
      %s47 = int_to_ptr.vmem [resolvable:$true] %s46
      %52 = dma.hbm_to_vmem [thread:$0]  %s2, 2048, %s47, [#allocation6], 128, 128, 8
    $region13: #{tpu_custom_call.1} parent=1 // pred_fallthru
      _
    // Predicated region
    $region14: #{tpu_custom_call.1} parent=1 // pred_check
      _
    $region15: #{tpu_custom_call.1} parent=1 // pred_check_branch
      %54 = sbr.rel (0) target = $region17
    $region16: #{tpu_custom_call.1} parent=1 // pred_region
      _
    $region17: #{tpu_custom_call.1} parent=1 // pred_fallthru
      _
    // Predicated region
    $region18: #{tpu_custom_call.1} parent=1 // pred_check
      _
    $region19: #{tpu_custom_call.1} parent=1 // pred_check_branch
      %56 = sbr.rel (0) target = $region21
    $region20: #{tpu_custom_call.1} parent=1 // pred_region
      %s58 = ssub.s32 2048, 2048
      %59 = vsyncadd [#allocation9], %s58
      %s60 = sshll.u32 [#allocation8], 4
      %s61 = int_to_ptr.vmem [resolvable:$true] %s60
      %66 = dma.hbm_to_vmem [thread:$0]  %s4, 2048, %s61, [#allocation9], 128, 128, 8
    $region21: #{tpu_custom_call.1} parent=1 // pred_fallthru
      _
    // Predicated region
    $region22: #{tpu_custom_call.1} parent=1 // pred_check
      _
    $region23: #{tpu_custom_call.1} parent=1 // pred_check_branch
      %68 = sbr.rel (0) target = $region25
    $region24: #{tpu_custom_call.1} parent=1 // pred_region
      _
    $region25: #{tpu_custom_call.1} parent=1 // pred_fallthru
      _
    // Predicated region
    $region26: #{tpu_custom_call.1} parent=1 // pred_check
      _
    $region27: #{tpu_custom_call.1} parent=1 // pred_check_branch
      %70 = sbr.rel (0) target = $region29
    $region28: #{tpu_custom_call.1} parent=1 // pred_region
      %s72 = ssub.s32 2048, 2048
      %73 = vsyncadd [#allocation9], %s72
      %s74 = sshll.u32 [#allocation10], 4
      %s75 = int_to_ptr.vmem [resolvable:$true] %s74
      %80 = dma.hbm_to_vmem [thread:$0]  %s6, 2048, %s75, [#allocation9], 128, 128, 8
    $region29: #{tpu_custom_call.1} parent=1 // pred_fallthru
      _
    // Predicated region
    $region30: #{tpu_custom_call.1} parent=1 // pred_check
      _
    $region31: #{tpu_custom_call.1} parent=1 // pred_check_branch
      %82 = sbr.rel (0) target = $region33
    $region32: #{tpu_custom_call.1} parent=1 // pred_region
      _
    $region33: #{tpu_custom_call.1} parent=1 // pred_fallthru
      _
    // Predicated region
    $region34: #{tpu_custom_call.1} parent=1 // pred_check
      _
    $region35: #{tpu_custom_call.1} parent=1 // pred_check_branch
      %84 = sbr.rel (0) target = $region37
    $region36: #{tpu_custom_call.1} parent=1 // pred_region
      %85 = dma.done [#allocation3], 256
    $region37: #{tpu_custom_call.1} parent=1 // pred_fallthru
      _
    // Predicated region
    $region38: #{tpu_custom_call.1} parent=1 // pred_check
      _
    $region39: #{tpu_custom_call.1} parent=1 // pred_check_branch
      %87 = sbr.rel (0) target = $region41
    $region40: #{tpu_custom_call.1} parent=1 // pred_region
      %88 = dma.done [#allocation6], 256
    $region41: #{tpu_custom_call.1} parent=1 // pred_fallthru
      _
    // Predicated region
    $region42: #{tpu_custom_call.1} parent=1 // pred_check
      _
    $region43: #{tpu_custom_call.1} parent=1 // pred_check_branch
      %90 = sbr.rel (0) target = $region45
    $region44: #{tpu_custom_call.1} parent=1 // pred_region
      %91 = dma.done [#allocation6], 2048
    $region45: #{tpu_custom_call.1} parent=1 // pred_fallthru
      _
    // Predicated region
    $region46: #{tpu_custom_call.1} parent=1 // pred_check
      _
    $region47: #{tpu_custom_call.1} parent=1 // pred_check_branch
      %93 = sbr.rel (0) target = $region49
    $region48: #{tpu_custom_call.1} parent=1 // pred_region
      %94 = dma.done [#allocation9], 2048
    $region49: #{tpu_custom_call.1} parent=1 // pred_fallthru
      _
    // Predicated region
    $region50: #{tpu_custom_call.1} parent=1 // pred_check
      _
    $region51: #{tpu_custom_call.1} parent=1 // pred_check_branch
      %96 = sbr.rel (0) target = $region53
    $region52: #{tpu_custom_call.1} parent=1 // pred_region
      %97 = dma.done [#allocation9], 2048
    $region53: #{tpu_custom_call.1} parent=1 // pred_fallthru
      _
    %v98 = vld [vmem:[#allocation2] sm:$0xff]
    %v99 = vld [vmem:[#allocation2 + $0x8] sm:$0xff]
    %v100 = vld [vmem:[#allocation5] sm:$0xff]
    %v101 = vld [vmem:[#allocation5 + $0x8] sm:$0xff]
    %v102 = vld [vmem:[%s3] sm:$0x1]
    %v103 = vld [vmem:[%s5] sm:$0x1]
    %v104 = vld [vmem:[%s7] sm:$0x1]
    %v105 = vld [vmem:[#allocation7] sm:$0xff]
    %v106 = vld [vmem:[#allocation7 + $0x8] sm:$0xff]
    %v107 = vld [vmem:[#allocation7 + $0x10] sm:$0xff]
    %v108 = vld [vmem:[#allocation7 + $0x18] sm:$0xff]
    %v109 = vld [vmem:[#allocation7 + $0x20] sm:$0xff]
    %v110 = vld [vmem:[#allocation7 + $0x28] sm:$0xff]
    %v111 = vld [vmem:[#allocation7 + $0x30] sm:$0xff]
    %v112 = vld [vmem:[#allocation7 + $0x38] sm:$0xff]
    %v113 = vld [vmem:[#allocation7 + $0x40] sm:$0xff]
    %v114 = vld [vmem:[#allocation7 + $0x48] sm:$0xff]
    %v115 = vld [vmem:[#allocation7 + $0x50] sm:$0xff]
    %v116 = vld [vmem:[#allocation7 + $0x58] sm:$0xff]
    %v117 = vld [vmem:[#allocation7 + $0x60] sm:$0xff]
    %v118 = vld [vmem:[#allocation7 + $0x68] sm:$0xff]
    %v119 = vld [vmem:[#allocation7 + $0x70] sm:$0xff]
    %v120 = vld [vmem:[#allocation7 + $0x78] sm:$0xff]
    %v122 = vlaneseq
    %v123 = vshrl.u32 %v122, 7
    %v124 = vsub.s32 0, %v123
    %v125 = vrot.slane %v102, %v124
    %127 = vmatprep.subr.mxu0 0.0
    %128 = vmatpush1.msra.mxu0 %v105
    %129 = vmatprep.subr.mxu0 0.0
    %130 = vmatpush1.msra.mxu0 %v106
    %131 = vmatprep.subr.mxu0 0.0
    %132 = vmatpush1.msra.mxu0 %v107
    %133 = vmatprep.subr.mxu0 0.0
    %134 = vmatpush1.msra.mxu0 %v108
    %135 = vmatprep.subr.mxu0 0.0
    %136 = vmatpush1.msra.mxu0 %v109
    %137 = vmatprep.subr.mxu0 0.0
    %138 = vmatpush1.msra.mxu0 %v110
    %139 = vmatprep.subr.mxu0 0.0
    %140 = vmatpush1.msra.mxu0 %v111
    %141 = vmatprep.subr.mxu0 0.0
    %142 = vmatpush1.msra.mxu0 %v112
    %143 = vmatprep.subr.mxu0 0.0
    %144 = vmatpush1.msra.mxu0 %v113
    %145 = vmatprep.subr.mxu0 0.0
    %146 = vmatpush1.msra.mxu0 %v114
    %147 = vmatprep.subr.mxu0 0.0
    %148 = vmatpush1.msra.mxu0 %v115
    %149 = vmatprep.subr.mxu0 0.0
    %150 = vmatpush1.msra.mxu0 %v116
    %151 = vmatprep.subr.mxu0 0.0
    %152 = vmatpush1.msra.mxu0 %v117
    %153 = vmatprep.subr.mxu0 0.0
    %154 = vmatpush1.msra.mxu0 %v118
    %155 = vmatprep.subr.mxu0 0.0
    %156 = vmatpush1.msra.mxu0 %v119
    %157 = vmatprep.subr.mxu0 0.0
    %158 = vmatpush1.msra.mxu0 %v120
    %159 = vmatprep.subr.mxu0 0.0
    %160 = vmatpush1.msra.mxu0 0.0
    %161 = vmatprep.subr.mxu0 0.0
    %162 = vmatpush1.msra.mxu0 0.0
    %163 = vmatprep.subr.mxu0 0.0
    %164 = vmatpush1.msra.mxu0 0.0
    %165 = vmatprep.subr.mxu0 0.0
    %166 = vmatpush1.msra.mxu0 0.0
    %167 = vmatprep.subr.mxu0 0.0
    %168 = vmatpush1.msra.mxu0 0.0
    %169 = vmatprep.subr.mxu0 0.0
    %170 = vmatpush1.msra.mxu0 0.0
    %171 = vmatprep.subr.mxu0 0.0
    %172 = vmatpush1.msra.mxu0 0.0
    %173 = vmatprep.subr.mxu0 0.0
    %174 = vmatpush1.msra.mxu0 0.0
    %175 = vmatprep.subr.mxu0 0.0
    %176 = vmatpush1.msra.mxu0 0.0
    %177 = vmatprep.subr.mxu0 0.0
    %178 = vmatpush1.msra.mxu0 0.0
    %179 = vmatprep.subr.mxu0 0.0
    %180 = vmatpush1.msra.mxu0 0.0
    %181 = vmatprep.subr.mxu0 0.0
    %182 = vmatpush1.msra.mxu0 0.0
    %183 = vmatprep.subr.mxu0 0.0
    %184 = vmatpush1.msra.mxu0 0.0
    %185 = vmatprep.subr.mxu0 0.0
    %186 = vmatpush1.msra.mxu0 0.0
    %187 = vmatprep.subr.mxu0 0.0
    %188 = vmatpush1.msra.mxu0 0.0
    %189 = vmatprep.subr.mxu0 0.0
    %190 = vmatpush1.msra.mxu0 0.0
    %191 = vmatprep.mubr.f32.mxu0 0.0
    %192 = vmatmul.mubr.f32.gmra.mrb[0].mxu0 %v98
    %v193 = vpop.f32.mrb[0].mxu0
    %v194 = vadd.f32 %v125, %v193
    %v195 = vpop.f32.mrb[0].mxu0
    %196 = vmatprep.mubr.f32.mxu0 0.0
    %197 = vmatmul.mubr.f32.gmra.mrb[0].mxu0 %v99
    %v198 = vpop.f32.mrb[0].mxu0
    %v199 = vadd.f32 %v125, %v198
    %v200 = vpop.f32.mrb[0].mxu0
    %201 = vdwg.mxu0
    %v202 = vld [vmem:[#allocation8] sm:$0xff]
    %v203 = vld [vmem:[#allocation8 + $0x8] sm:$0xff]
    %v204 = vld [vmem:[#allocation8 + $0x10] sm:$0xff]
    %v205 = vld [vmem:[#allocation8 + $0x18] sm:$0xff]
    %v206 = vld [vmem:[#allocation8 + $0x20] sm:$0xff]
    %v207 = vld [vmem:[#allocation8 + $0x28] sm:$0xff]
    %v208 = vld [vmem:[#allocation8 + $0x30] sm:$0xff]
    %v209 = vld [vmem:[#allocation8 + $0x38] sm:$0xff]
    %v210 = vld [vmem:[#allocation8 + $0x40] sm:$0xff]
    %v211 = vld [vmem:[#allocation8 + $0x48] sm:$0xff]
    %v212 = vld [vmem:[#allocation8 + $0x50] sm:$0xff]
    %v213 = vld [vmem:[#allocation8 + $0x58] sm:$0xff]
    %v214 = vld [vmem:[#allocation8 + $0x60] sm:$0xff]
    %v215 = vld [vmem:[#allocation8 + $0x68] sm:$0xff]
    %v216 = vld [vmem:[#allocation8 + $0x70] sm:$0xff]
    %v217 = vld [vmem:[#allocation8 + $0x78] sm:$0xff]
    %v219 = vlaneseq
    %v220 = vshrl.u32 %v219, 7
    %v221 = vsub.s32 0, %v220
    %v222 = vrot.slane %v103, %v221
    %224 = vmatprep.subr.mxu0 0.0
    %225 = vmatpush1.msra.mxu0 %v202
    %226 = vmatprep.subr.mxu0 0.0
    %227 = vmatpush1.msra.mxu0 %v203
    %228 = vmatprep.subr.mxu0 0.0
    %229 = vmatpush1.msra.mxu0 %v204
    %230 = vmatprep.subr.mxu0 0.0
    %231 = vmatpush1.msra.mxu0 %v205
    %232 = vmatprep.subr.mxu0 0.0
    %233 = vmatpush1.msra.mxu0 %v206
    %234 = vmatprep.subr.mxu0 0.0
    %235 = vmatpush1.msra.mxu0 %v207
    %236 = vmatprep.subr.mxu0 0.0
    %237 = vmatpush1.msra.mxu0 %v208
    %238 = vmatprep.subr.mxu0 0.0
    %239 = vmatpush1.msra.mxu0 %v209
    %240 = vmatprep.subr.mxu0 0.0
    %241 = vmatpush1.msra.mxu0 %v210
    %242 = vmatprep.subr.mxu0 0.0
    %243 = vmatpush1.msra.mxu0 %v211
    %244 = vmatprep.subr.mxu0 0.0
    %245 = vmatpush1.msra.mxu0 %v212
    %246 = vmatprep.subr.mxu0 0.0
    %247 = vmatpush1.msra.mxu0 %v213
    %248 = vmatprep.subr.mxu0 0.0
    %249 = vmatpush1.msra.mxu0 %v214
    %250 = vmatprep.subr.mxu0 0.0
    %251 = vmatpush1.msra.mxu0 %v215
    %252 = vmatprep.subr.mxu0 0.0
    %253 = vmatpush1.msra.mxu0 %v216
    %254 = vmatprep.subr.mxu0 0.0
    %255 = vmatpush1.msra.mxu0 %v217
    %256 = vmatprep.subr.mxu0 0.0
    %257 = vmatpush1.msra.mxu0 0.0
    %258 = vmatprep.subr.mxu0 0.0
    %259 = vmatpush1.msra.mxu0 0.0
    %260 = vmatprep.subr.mxu0 0.0
    %261 = vmatpush1.msra.mxu0 0.0
    %262 = vmatprep.subr.mxu0 0.0
    %263 = vmatpush1.msra.mxu0 0.0
    %264 = vmatprep.subr.mxu0 0.0
    %265 = vmatpush1.msra.mxu0 0.0
    %266 = vmatprep.subr.mxu0 0.0
    %267 = vmatpush1.msra.mxu0 0.0
    %268 = vmatprep.subr.mxu0 0.0
    %269 = vmatpush1.msra.mxu0 0.0
    %270 = vmatprep.subr.mxu0 0.0
    %271 = vmatpush1.msra.mxu0 0.0
    %272 = vmatprep.subr.mxu0 0.0
    %273 = vmatpush1.msra.mxu0 0.0
    %274 = vmatprep.subr.mxu0 0.0
    %275 = vmatpush1.msra.mxu0 0.0
    %276 = vmatprep.subr.mxu0 0.0
    %277 = vmatpush1.msra.mxu0 0.0
    %278 = vmatprep.subr.mxu0 0.0
    %279 = vmatpush1.msra.mxu0 0.0
    %280 = vmatprep.subr.mxu0 0.0
    %281 = vmatpush1.msra.mxu0 0.0
    %282 = vmatprep.subr.mxu0 0.0
    %283 = vmatpush1.msra.mxu0 0.0
    %284 = vmatprep.subr.mxu0 0.0
    %285 = vmatpush1.msra.mxu0 0.0
    %286 = vmatprep.subr.mxu0 0.0
    %287 = vmatpush1.msra.mxu0 0.0
    %288 = vmatprep.mubr.f32.mxu0 0.0
    %289 = vmatmul.mubr.f32.gmra.mrb[0].mxu0 %v100
    %v290 = vpop.f32.mrb[0].mxu0
    %v291 = vadd.f32 %v222, %v290
    %v292 = vpop.f32.mrb[0].mxu0
    %293 = vmatprep.mubr.f32.mxu0 0.0
    %294 = vmatmul.mubr.f32.gmra.mrb[0].mxu0 %v101
    %v295 = vpop.f32.mrb[0].mxu0
    %v296 = vadd.f32 %v222, %v295
    %v297 = vpop.f32.mrb[0].mxu0
    %298 = vdwg.mxu0
    %v299 = vadd.f32 %v102, %v102
    %v300 = vadd.f32 %v103, %v103
    %v301 = vmax.f32 %v194, 0.0
    %v302 = vmax.f32 %v199, 0.0
    %v304 = vlaneseq
    %v305 = vshrl.u32 %v304, 7
    %v306 = vsub.s32 0, %v305
    %v307 = vrot.slane %v299, %v306
    %v309 = vsub.f32 %v307, %v194
    %v310 = vsub.f32 %v307, %v199
    %v311 = vmax.f32 %v309, 0.0
    %v312 = vmax.f32 %v310, 0.0
    %v313 = vsub.f32 %v301, %v311
    %v314 = vsub.f32 %v302, %v312
    %v315 = vmax.f32 %v291, 0.0
    %v316 = vmax.f32 %v296, 0.0
    %v318 = vlaneseq
    %v319 = vshrl.u32 %v318, 7
    %v320 = vsub.s32 0, %v319
    %v321 = vrot.slane %v300, %v320
    %v323 = vsub.f32 %v321, %v291
    %v324 = vsub.f32 %v321, %v296
    %v325 = vmax.f32 %v323, 0.0
    %v326 = vmax.f32 %v324, 0.0
    %v327 = vsub.f32 %v315, %v325
    %v328 = vsub.f32 %v316, %v326
    %v329 = vld [vmem:[#allocation10] sm:$0xff]
    %v330 = vld [vmem:[#allocation10 + $0x8] sm:$0xff]
    %v331 = vld [vmem:[#allocation10 + $0x10] sm:$0xff]
    %v332 = vld [vmem:[#allocation10 + $0x18] sm:$0xff]
    %v333 = vld [vmem:[#allocation10 + $0x20] sm:$0xff]
    %v334 = vld [vmem:[#allocation10 + $0x28] sm:$0xff]
    %v335 = vld [vmem:[#allocation10 + $0x30] sm:$0xff]
    %v336 = vld [vmem:[#allocation10 + $0x38] sm:$0xff]
    %v337 = vld [vmem:[#allocation10 + $0x40] sm:$0xff]
    %v338 = vld [vmem:[#allocation10 + $0x48] sm:$0xff]
    %v339 = vld [vmem:[#allocation10 + $0x50] sm:$0xff]
    %v340 = vld [vmem:[#allocation10 + $0x58] sm:$0xff]
    %v341 = vld [vmem:[#allocation10 + $0x60] sm:$0xff]
    %v342 = vld [vmem:[#allocation10 + $0x68] sm:$0xff]
    %v343 = vld [vmem:[#allocation10 + $0x70] sm:$0xff]
    %v344 = vld [vmem:[#allocation10 + $0x78] sm:$0xff]
    %v346 = vlaneseq
    %v347 = vshrl.u32 %v346, 7
    %v348 = vsub.s32 0, %v347
    %v349 = vrot.slane %v104, %v348
    %351 = vmatprep.subr.mxu0 0.0
    %352 = vmatpush1.msra.mxu0 %v329
    %353 = vmatprep.subr.mxu0 0.0
    %354 = vmatpush1.msra.mxu0 %v330
    %355 = vmatprep.subr.mxu0 0.0
    %356 = vmatpush1.msra.mxu0 %v331
    %357 = vmatprep.subr.mxu0 0.0
    %358 = vmatpush1.msra.mxu0 %v332
    %359 = vmatprep.subr.mxu0 0.0
    %360 = vmatpush1.msra.mxu0 %v333
    %361 = vmatprep.subr.mxu0 0.0
    %362 = vmatpush1.msra.mxu0 %v334
    %363 = vmatprep.subr.mxu0 0.0
    %364 = vmatpush1.msra.mxu0 %v335
    %365 = vmatprep.subr.mxu0 0.0
    %366 = vmatpush1.msra.mxu0 %v336
    %367 = vmatprep.subr.mxu0 0.0
    %368 = vmatpush1.msra.mxu0 %v337
    %369 = vmatprep.subr.mxu0 0.0
    %370 = vmatpush1.msra.mxu0 %v338
    %371 = vmatprep.subr.mxu0 0.0
    %372 = vmatpush1.msra.mxu0 %v339
    %373 = vmatprep.subr.mxu0 0.0
    %374 = vmatpush1.msra.mxu0 %v340
    %375 = vmatprep.subr.mxu0 0.0
    %376 = vmatpush1.msra.mxu0 %v341
    %377 = vmatprep.subr.mxu0 0.0
    %378 = vmatpush1.msra.mxu0 %v342
    %379 = vmatprep.subr.mxu0 0.0
    %380 = vmatpush1.msra.mxu0 %v343
    %381 = vmatprep.subr.mxu0 0.0
    %382 = vmatpush1.msra.mxu0 %v344
    %383 = vmatprep.subr.mxu0 0.0
    %384 = vmatpush1.msra.mxu0 0.0
    %385 = vmatprep.subr.mxu0 0.0
    %386 = vmatpush1.msra.mxu0 0.0
    %387 = vmatprep.subr.mxu0 0.0
    %388 = vmatpush1.msra.mxu0 0.0
    %389 = vmatprep.subr.mxu0 0.0
    %390 = vmatpush1.msra.mxu0 0.0
    %391 = vmatprep.subr.mxu0 0.0
    %392 = vmatpush1.msra.mxu0 0.0
    %393 = vmatprep.subr.mxu0 0.0
    %394 = vmatpush1.msra.mxu0 0.0
    %395 = vmatprep.subr.mxu0 0.0
    %396 = vmatpush1.msra.mxu0 0.0
    %397 = vmatprep.subr.mxu0 0.0
    %398 = vmatpush1.msra.mxu0 0.0
    %399 = vmatprep.subr.mxu0 0.0
    %400 = vmatpush1.msra.mxu0 0.0
    %401 = vmatprep.subr.mxu0 0.0
    %402 = vmatpush1.msra.mxu0 0.0
    %403 = vmatprep.subr.mxu0 0.0
    %404 = vmatpush1.msra.mxu0 0.0
    %405 = vmatprep.subr.mxu0 0.0
    %406 = vmatpush1.msra.mxu0 0.0
    %407 = vmatprep.subr.mxu0 0.0
    %408 = vmatpush1.msra.mxu0 0.0
    %409 = vmatprep.subr.mxu0 0.0
    %410 = vmatpush1.msra.mxu0 0.0
    %411 = vmatprep.subr.mxu0 0.0
    %412 = vmatpush1.msra.mxu0 0.0
    %413 = vmatprep.subr.mxu0 0.0
    %414 = vmatpush1.msra.mxu0 0.0
    %415 = vmatprep.mubr.f32.mxu0 0.0
    %416 = vmatmul.mubr.f32.gmra.mrb[0].mxu0 %v313
    %v417 = vpop.f32.mrb[0].mxu0
    %v418 = vadd.f32 %v349, %v417
    %v419 = vpop.f32.mrb[0].mxu0
    %420 = vmatprep.mubr.f32.mxu0 0.0
    %421 = vmatmul.mubr.f32.gmra.mrb[0].mxu0 %v314
    %v422 = vpop.f32.mrb[0].mxu0
    %v423 = vadd.f32 %v349, %v422
    %v424 = vpop.f32.mrb[0].mxu0
    %425 = vmatprep.mubr.f32.mxu0 0.0
    %426 = vmatmul.mubr.f32.gmra.mrb[0].mxu0 %v327
    %v427 = vpop.f32.mrb[0].mxu0
    %v428 = vadd.f32 %v349, %v427
    %v429 = vpop.f32.mrb[0].mxu0
    %430 = vmatprep.mubr.f32.mxu0 0.0
    %431 = vmatmul.mubr.f32.gmra.mrb[0].mxu0 %v328
    %v432 = vpop.f32.mrb[0].mxu0
    %v433 = vadd.f32 %v349, %v432
    %v434 = vpop.f32.mrb[0].mxu0
    %435 = vdwg.mxu0
    %v436 = vmul.f32 %v313, %v313
    %v437 = vmul.f32 %v314, %v314
    %438 = vadd.xlane.f32.xlu0 %v436
    %v439 = vpop.xlane.xlu0 %438
    %440 = vadd.xlane.f32.xlu0 %v437
    %v441 = vpop.xlane.xlu0 %440
    %v442 = vmul.f32 %v327, %v327
    %v443 = vmul.f32 %v328, %v328
    %444 = vadd.xlane.f32.xlu0 %v442
    %v445 = vpop.xlane.xlu0 %444
    %446 = vadd.xlane.f32.xlu0 %v443
    %v447 = vpop.xlane.xlu0 %446
    %v448 = vmul.f32 %v418, %v418
    %v449 = vmul.f32 %v423, %v423
    %450 = vadd.xlane.f32.xlu0 %v448
    %v451 = vpop.xlane.xlu0 %450
    %452 = vadd.xlane.f32.xlu0 %v449
    %v453 = vpop.xlane.xlu0 %452
    %v454 = vmul.f32 %v428, %v428
    %v455 = vmul.f32 %v433, %v433
    %456 = vadd.xlane.f32.xlu0 %v454
    %v457 = vpop.xlane.xlu0 %456
    %458 = vadd.xlane.f32.xlu0 %v455
    %v459 = vpop.xlane.xlu0 %458
    %v460 = vmul.f32 %v418, %v327
    %v461 = vmul.f32 %v423, %v328
    %462 = vadd.xlane.f32.xlu0 %v460
    %v463 = vpop.xlane.xlu0 %462
    %464 = vadd.xlane.f32.xlu0 %v461
    %v465 = vpop.xlane.xlu0 %464
    %v466 = vmul.f32 %v313, %v428
    %v467 = vmul.f32 %v314, %v433
    %468 = vadd.xlane.f32.xlu0 %v466
    %v469 = vpop.xlane.xlu0 %468
    %470 = vadd.xlane.f32.xlu0 %v467
    %v471 = vpop.xlane.xlu0 %470
    %v472 = vmax.f32 %v439, 1e-24
    %v473 = vmax.f32 %v441, 1e-24
    %v474 = vrsqrt.pop %v472
    %v475 = vrsqrt.pop %v473
    %v476 = vmax.f32 %v445, 1e-24
    %v477 = vmax.f32 %v447, 1e-24
    %v478 = vrsqrt.pop %v476
    %v479 = vrsqrt.pop %v477
    %v480 = vmax.f32 %v451, 1e-24
    %v481 = vmax.f32 %v453, 1e-24
    %v482 = vrsqrt.pop %v480
    %v483 = vrsqrt.pop %v481
    %v484 = vmax.f32 %v457, 1e-24
    %v485 = vmax.f32 %v459, 1e-24
    %v486 = vrsqrt.pop %v484
    %v487 = vrsqrt.pop %v485
    %v488 = vmul.f32 %v451, %v482
    %v489 = vmul.f32 %v453, %v483
    %v490 = vmul.f32 %v488, %v482
    %v491 = vmul.f32 %v489, %v483
    %v492 = vmul.f32 %v445, %v478
    %v493 = vmul.f32 %v447, %v479
    %v494 = vmul.f32 %v492, %v478
    %v495 = vmul.f32 %v493, %v479
    %v496 = vadd.f32 %v490, %v494
    %v497 = vadd.f32 %v491, %v495
    %v498 = vmul.f32 %v463, 2.0
    %v499 = vmul.f32 %v465, 2.0
    %v500 = vmul.f32 %v498, %v482
    %v501 = vmul.f32 %v499, %v483
    %v502 = vmul.f32 %v500, %v478
    %v503 = vmul.f32 %v501, %v479
    %v504 = vsub.f32 %v496, %v502
    %v505 = vsub.f32 %v497, %v503
    %v506 = vmul.f32 %v439, %v474
    %v507 = vmul.f32 %v441, %v475
    %v508 = vmul.f32 %v506, %v474
    %v509 = vmul.f32 %v507, %v475
    %v510 = vmul.f32 %v457, %v486
    %v511 = vmul.f32 %v459, %v487
    %v512 = vmul.f32 %v510, %v486
    %v513 = vmul.f32 %v511, %v487
    %v514 = vadd.f32 %v508, %v512
    %v515 = vadd.f32 %v509, %v513
    %v516 = vmul.f32 %v469, 2.0
    %v517 = vmul.f32 %v471, 2.0
    %v518 = vmul.f32 %v516, %v474
    %v519 = vmul.f32 %v517, %v475
    %v520 = vmul.f32 %v518, %v486
    %v521 = vmul.f32 %v519, %v487
    %v522 = vsub.f32 %v514, %v520
    %v523 = vsub.f32 %v515, %v521
    %v524 = vlaneseq
    %v525 = vshrl.u32 %v524, 7
    %v526 = vadd.s32 %v525, 8
    %s527 = smul.u32 0, 16
    %v528 = vstv %s527
    %v529 = vadd.s32 %v525, %v528
    %v530 = vadd.s32 %v526, %v528
    %vm531 = vcmp.lt.s32.totalorder %v529, 8
    %vm532 = vcmp.lt.s32.totalorder %v530, 8
    %v533 = vsel %vm531, 1, 0
    %v534 = vsel %vm532, 1, 0
    %v535 = vcvt.s32.f32 %v533
    %v536 = vcvt.s32.f32 %v534
    %v537 = vadd.f32 %v504, %v522
    %v538 = vadd.f32 %v505, %v523
    %v539 = vmul.f32 %v537, 0.5
    %v540 = vmul.f32 %v538, 0.5
    %v541 = vmul.f32 %v539, %v535
    %v542 = vmul.f32 %v540, %v536
    %vm543 = vcmask 7168
    %v544 = vsel %vm543, %v541, 0.0
    %v545 = vsel %vm543, %v542, 0.0
    %v546 = vadd.f32 %v544, %v545
    %547 = vadd.xlane.f32.xlu0 %v546
    %v548 = vpop.xlane.xlu0 %547
    %v549 = vrot.slane %v548, 4
    %v550 = vadd.f32 %v548, %v549
    %v551 = vrot.slane %v550, 2
    %v552 = vadd.f32 %v550, %v551
    %v553 = vrot.slane %v552, 1
    %v554 = vadd.f32 %v552, %v553
    %s555 = vtos %v554
    %v556 = vstv %s555
    %557 = vst [vmem:[#allocation11] sm:$0x1] %v556
    // Predicated region
    $region54: #{tpu_custom_call.1} parent=1 // pred_check
      _
    $region55: #{tpu_custom_call.1} parent=1 // pred_check_branch
      %559 = sbr.rel (0) target = $region57
    $region56: #{tpu_custom_call.1} parent=1 // pred_region
      %s561 = ssub.s32 16, 16
      %562 = vsyncadd [#allocation4], %s561
      %s564 = sshll.u32 [#allocation11], 4
      %s565 = int_to_ptr.vmem [resolvable:$true] %s564
      %567 = dma.vmem_to_hbm [thread:$0]  %s565, 16, %s8, [#allocation4]
    $region57: #{tpu_custom_call.1} parent=1 // pred_fallthru
      _
    // Predicated region
    $region58: #{tpu_custom_call.1} parent=1 // pred_check
      _
    $region59: #{tpu_custom_call.1} parent=1 // pred_check_branch
      %569 = sbr.rel (0) target = $region61
    $region60: #{tpu_custom_call.1} parent=1 // pred_region
      %570 = dma.done [#allocation4], 16
    $region61: #{tpu_custom_call.1} parent=1 // pred_fallthru
      _
    %571 = vsyncpa [#allocation3], 1
    %572 = vsyncpa [#allocation6], 1
    %573 = vsyncpa [#allocation9], 1
    %574 = vsyncpa [#allocation4], 1

</llo_original>
